<compile_context>
chip_gen: v7x
topology: tpu7x:2x2x1
jax: 0.10.0
libtpu: 0.0.40
codegen_flags: <defaults>
</compile_context>

<pallas_src>
import jax
import jax.numpy as jnp
from jax.experimental import pallas as pl
from jax.experimental.pallas import tpu as pltpu


def _linear_sub_relu_kernel(x_ref, w_ref, b_ref, other_ref, o_ref):
    x = x_ref[...]                           # (B, IN)   f32, VMEM
    w = w_ref[...]                           # (IN, OUT) f32, VMEM
    b_eff = b_ref[...] - other_ref[0, 0]     # (1, OUT): one VPU subtract
    acc = jnp.dot(x, w, preferred_element_type=jnp.float32)   # single MXU matmul
    o_ref[...] = jnp.maximum(acc + b_eff, 0.0).astype(o_ref.dtype)


@jax.jit
def linear_sub_relu(x, w, b_row, other_scalar):
    """relu(x @ w + b - other).

    x:            (B, IN)  float32
    w:            (IN, OUT) float32  (PyTorch weight transposed)
    b_row:        (1, OUT) float32   (bias, pre-reshaped once at init)
    other_scalar: (1, 1)   float32   (scalar parameter, lives in SMEM)
    """
    B, _ = x.shape
    OUT = w.shape[1]
    return pl.pallas_call(
        _linear_sub_relu_kernel,
        out_shape=jax.ShapeDtypeStruct((B, OUT), jnp.float32),
        in_specs=[
            pl.BlockSpec(memory_space=pltpu.MemorySpace.VMEM),   # x  (whole array)
            pl.BlockSpec(memory_space=pltpu.MemorySpace.VMEM),   # w  (whole array)
            pl.BlockSpec(memory_space=pltpu.MemorySpace.VMEM),   # b  (1, OUT)
            pl.BlockSpec(memory_space=pltpu.MemorySpace.SMEM),   # other (1, 1) scalar
        ],
        out_specs=pl.BlockSpec(memory_space=pltpu.MemorySpace.VMEM),
    )(x, w, b_row, other_scalar)


if __name__ == "__main__":
    key = jax.random.PRNGKey(0)
    kx, kw, kb = jax.random.split(key, 3)

    # Input matching the PyTorch module: x1 = torch.randn(1, 5)
    x1 = jax.random.normal(kx, (1, 5), dtype=jnp.float32)

    # Deterministic parameter init for Linear(5, 5): uniform(-1/sqrt(5), 1/sqrt(5)).
    # Weight stored as (in_features, out_features) == W^T of PyTorch's (out, in).
    bound = 1.0 / (5.0 ** 0.5)
    w = jax.random.uniform(kw, (5, 5), dtype=jnp.float32, minval=-bound, maxval=bound)
    b = jax.random.uniform(kb, (5,), dtype=jnp.float32, minval=-bound, maxval=bound)

    # One-time parameter layout (done at init, not per call):
    b_row = b.reshape(1, 5)                            # (1, OUT) for VMEM
    other_scalar = jnp.full((1, 1), 1.0, jnp.float32)  # nn.Parameter(other), other = 1

    out = linear_sub_relu(x1, w, b_row, other_scalar)
    out = jax.block_until_ready(out)

    # Reference check in plain JAX
    ref = jnp.maximum(x1 @ w + b - 1.0, 0.0)
    assert out.shape == (1, 5)
    assert jnp.allclose(out, ref, atol=1e-5), (out, ref)

    print("KERNEL_OK")
</pallas_src>

<mosaic_0001>
module attributes {stable_mosaic.version = 11 : i64} {
  func.func @_linear_sub_relu_kernel(%arg0: memref<1x5xf32, #tpu.memory_space<vmem>>, %arg1: memref<5x5xf32, #tpu.memory_space<vmem>>, %arg2: memref<1x5xf32, #tpu.memory_space<vmem>>, %arg3: memref<1x1xf32, #tpu.memory_space<smem>>, %arg4: memref<1x5xf32, #tpu.memory_space<vmem>>) attributes {dimension_semantics = [], scalar_prefetch = 0 : i64, scratch_operands = 0 : i64, tpu.core_type = #tpu.core_type<tc>} {
    %c0 = arith.constant 0 : index
    %c0_0 = arith.constant 0 : index
    %0 = vector.load %arg0[%c0, %c0_0] : memref<1x5xf32, #tpu.memory_space<vmem>>, vector<1x5xf32>
    %c0_1 = arith.constant 0 : index
    %c0_2 = arith.constant 0 : index
    %1 = vector.load %arg1[%c0_1, %c0_2] : memref<5x5xf32, #tpu.memory_space<vmem>>, vector<5x5xf32>
    %c0_3 = arith.constant 0 : index
    %c0_4 = arith.constant 0 : index
    %2 = vector.load %arg2[%c0_3, %c0_4] : memref<1x5xf32, #tpu.memory_space<vmem>>, vector<1x5xf32>
    %c0_5 = arith.constant 0 : index
    %c0_6 = arith.constant 0 : index
    %3 = memref.load %arg3[%c0_5, %c0_6] : memref<1x1xf32, #tpu.memory_space<smem>>
    %4 = vector.broadcast %3 : f32 to vector<1x5xf32>
    %5 = arith.subf %2, %4 : vector<1x5xf32>
    %cst = arith.constant dense<0.000000e+00> : vector<1x5xf32>
    %6 = tpu.matmul %0, %1, %cst {dimension_numbers = #tpu.dot_dimension_numbers<[1], [0], [0], [1], [0, 0, 1, 1], [], []>} : vector<1x5xf32>, vector<5x5xf32>, vector<1x5xf32> -> vector<1x5xf32>
    %7 = arith.addf %6, %5 : vector<1x5xf32>
    %cst_7 = arith.constant 0.000000e+00 : f32
    %8 = vector.broadcast %cst_7 : f32 to vector<1x5xf32>
    %9 = arith.maximumf %7, %8 : vector<1x5xf32>
    %c0_8 = arith.constant 0 : index
    %c0_9 = arith.constant 0 : index
    %10 = vector.load %arg4[%c0_8, %c0_9] : memref<1x5xf32, #tpu.memory_space<vmem>>, vector<1x5xf32>
    tpu.vector_store %arg4[%c0_8, %c0_9], %9 {strides = array<i32>} : memref<1x5xf32, #tpu.memory_space<vmem>>, vector<1x5xf32>,
    return
  }
}

</mosaic_0001>

<llo_original>
// kernel: linear_sub_relu.1
$region0: #{linear_sub_relu.1}
  #allocation0 [shape = 'u32[]', space=smem, size = 0x4, offset = 0x4, fixed_abs, tag = 'smem constant byte address 0x4 - core index']
  #allocation1 [shape = 'u32[144,128]{1,0:T(1,128)}', space=vmem, size = 0x12000, scoped, tag = 'internal scratch']
  #allocation2 [shape = 'f32[1,1]{1,0:T(1,128)S(6)}', space=smem, size = 0x200, scoped, tag = 'scoped memory for linear_sub_relu.1']
  %s0 = inlined_call_operand.vmem [shape: f32[1,5], index: 0, kind: input, shape index: {}]
  %s1 = inlined_call_operand.hbm [shape: f32[5,5], index: 1, kind: input, shape index: {}]
  %s2 = inlined_call_operand.vmem [shape: f32[1,5], index: 2, kind: input, shape index: {}]
  %s3 = inlined_call_operand.<no memory space> [shape: f32[1,1], index: 3, kind: input, shape index: {}]
  %s4 = inlined_call_operand.hbm [shape: f32[1,5], index: 4, kind: output, shape index: {}]
  %s5 = sld [smem:[#allocation0]]
  $region30: #{linear_sub_relu.1} parent=0
    _
  %s7 = ssub.s32 1, %s5
  %s8 = scalar_select 0, %s7, %s5
  %9 = sst [smem:[#allocation2]] %s3
  $region1: #{linear_sub_relu.1} parent=0
    #allocation3 [shape = 'u8[4096]{0}', space=vmem, size = 0x1000, scoped, tag = 'input window, operand 1, single buffered']
    #allocation4 [shape = 's32[1]{0}', space=sflag, size = 0x4, scoped, tag = 'scoped memory for linear_sub_relu.1']
    #allocation5 [shape = 's32[1]{0}', space=sflag, size = 0x4, scoped, tag = 'scoped memory for linear_sub_relu.1']
    #allocation6 [shape = 'u8[512]{0}', space=vmem, size = 0x400, scoped, tag = 'output window, operand 0, single buffered']
    %10 = vsyncpa [#allocation4], 0
    %11 = vsyncpa [#allocation5], 0
    // Predicated region
    $region2: #{linear_sub_relu.1} parent=1 // pred_check
      _
    $region3: #{linear_sub_relu.1} parent=1 // pred_check_branch
      %13 = sbr.rel (0) target = $region5
    $region4: #{linear_sub_relu.1} parent=1 // pred_region
      _
    $region5: #{linear_sub_relu.1} parent=1 // pred_fallthru
      _
    // Predicated region
    $region6: #{linear_sub_relu.1} parent=1 // pred_check
      _
    $region7: #{linear_sub_relu.1} parent=1 // pred_check_branch
      %15 = sbr.rel (0) target = $region9
    $region8: #{linear_sub_relu.1} parent=1 // pred_region
      %s17 = ssub.s32 128, 128
      %18 = vsyncadd [#allocation4], %s17
      %s20 = sshll.u32 [#allocation3], 4
      %s21 = int_to_ptr.vmem [resolvable:$true] %s20
      %23 = dma.hbm_to_vmem [thread:$0]  %s1, 128, %s21, [#allocation4]
    $region9: #{linear_sub_relu.1} parent=1 // pred_fallthru
      _
    // Predicated region
    $region10: #{linear_sub_relu.1} parent=1 // pred_check
      _
    $region11: #{linear_sub_relu.1} parent=1 // pred_check_branch
      %25 = sbr.rel (0) target = $region13
    $region12: #{linear_sub_relu.1} parent=1 // pred_region
      _
    $region13: #{linear_sub_relu.1} parent=1 // pred_fallthru
      _
    // Predicated region
    $region14: #{linear_sub_relu.1} parent=1 // pred_check
      _
    $region15: #{linear_sub_relu.1} parent=1 // pred_check_branch
      %27 = sbr.rel (0) target = $region17
    $region16: #{linear_sub_relu.1} parent=1 // pred_region
      _
    $region17: #{linear_sub_relu.1} parent=1 // pred_fallthru
      _
    // Predicated region
    $region18: #{linear_sub_relu.1} parent=1 // pred_check
      _
    $region19: #{linear_sub_relu.1} parent=1 // pred_check_branch
      %29 = sbr.rel (0) target = $region21
    $region20: #{linear_sub_relu.1} parent=1 // pred_region
      %30 = dma.done [#allocation4], 128
    $region21: #{linear_sub_relu.1} parent=1 // pred_fallthru
      _
    %v31 = vld [vmem:[%s0] sm:$0x1]
    %v32 = vld [vmem:[#allocation3] sm:$0x1f]
    %v33 = vld [vmem:[%s2] sm:$0x1]
    %s34 = sld [smem:[#allocation2]]
    %v35 = vstv %s34
    %v36 = vsub.f32 %v33, %v35
    %vm37 = vcmask 39936
    %v39 = vsel %vm37, %v31, 0
    %vm41 = vcmask 1044480
    %v43 = vsel %vm41, %v32, 0
    %45 = vmatprep.subr.mxu0 0.0
    %46 = vmatpush1.msra.mxu0 %v43
    %47 = vmatprep.subr.mxu0 0.0
    %48 = vmatpush1.msra.mxu0 0.0
    %49 = vmatprep.subr.mxu0 0.0
    %50 = vmatpush1.msra.mxu0 0.0
    %51 = vmatprep.subr.mxu0 0.0
    %52 = vmatpush1.msra.mxu0 0.0
    %53 = vmatprep.subr.mxu0 0.0
    %54 = vmatpush1.msra.mxu0 0.0
    %55 = vmatprep.subr.mxu0 0.0
    %56 = vmatpush1.msra.mxu0 0.0
    %57 = vmatprep.subr.mxu0 0.0
    %58 = vmatpush1.msra.mxu0 0.0
    %59 = vmatprep.subr.mxu0 0.0
    %60 = vmatpush1.msra.mxu0 0.0
    %61 = vmatprep.subr.mxu0 0.0
    %62 = vmatpush1.msra.mxu0 0.0
    %63 = vmatprep.subr.mxu0 0.0
    %64 = vmatpush1.msra.mxu0 0.0
    %65 = vmatprep.subr.mxu0 0.0
    %66 = vmatpush1.msra.mxu0 0.0
    %67 = vmatprep.subr.mxu0 0.0
    %68 = vmatpush1.msra.mxu0 0.0
    %69 = vmatprep.subr.mxu0 0.0
    %70 = vmatpush1.msra.mxu0 0.0
    %71 = vmatprep.subr.mxu0 0.0
    %72 = vmatpush1.msra.mxu0 0.0
    %73 = vmatprep.subr.mxu0 0.0
    %74 = vmatpush1.msra.mxu0 0.0
    %75 = vmatprep.subr.mxu0 0.0
    %76 = vmatpush1.msra.mxu0 0.0
    %77 = vmatprep.subr.mxu0 0.0
    %78 = vmatpush1.msra.mxu0 0.0
    %79 = vmatprep.subr.mxu0 0.0
    %80 = vmatpush1.msra.mxu0 0.0
    %81 = vmatprep.subr.mxu0 0.0
    %82 = vmatpush1.msra.mxu0 0.0
    %83 = vmatprep.subr.mxu0 0.0
    %84 = vmatpush1.msra.mxu0 0.0
    %85 = vmatprep.subr.mxu0 0.0
    %86 = vmatpush1.msra.mxu0 0.0
    %87 = vmatprep.subr.mxu0 0.0
    %88 = vmatpush1.msra.mxu0 0.0
    %89 = vmatprep.subr.mxu0 0.0
    %90 = vmatpush1.msra.mxu0 0.0
    %91 = vmatprep.subr.mxu0 0.0
    %92 = vmatpush1.msra.mxu0 0.0
    %93 = vmatprep.subr.mxu0 0.0
    %94 = vmatpush1.msra.mxu0 0.0
    %95 = vmatprep.subr.mxu0 0.0
    %96 = vmatpush1.msra.mxu0 0.0
    %97 = vmatprep.subr.mxu0 0.0
    %98 = vmatpush1.msra.mxu0 0.0
    %99 = vmatprep.subr.mxu0 0.0
    %100 = vmatpush1.msra.mxu0 0.0
    %101 = vmatprep.subr.mxu0 0.0
    %102 = vmatpush1.msra.mxu0 0.0
    %103 = vmatprep.subr.mxu0 0.0
    %104 = vmatpush1.msra.mxu0 0.0
    %105 = vmatprep.subr.mxu0 0.0
    %106 = vmatpush1.msra.mxu0 0.0
    %107 = vmatprep.subr.mxu0 0.0
    %108 = vmatpush1.msra.mxu0 0.0
    %109 = vmatprep.mubr.f32.mxu0 0.0
    %110 = vmatmul.mubr.f32.gmra.mrb[0].mxu0 %v39
    %v111 = vpop.f32.mrb[0].mxu0
    %v112 = vadd.f32 %v36, %v111
    %v113 = vpop.f32.mrb[0].mxu0
    %114 = vdwg.mxu0
    %v115 = vmax.f32 %v112, 0.0
    %vm116 = vcmask 32768
    %117 = vst.msk [vmem:[#allocation6] sm:$0x1] %vm116, %v115
    // Predicated region
    $region22: #{linear_sub_relu.1} parent=1 // pred_check
      _
    $region23: #{linear_sub_relu.1} parent=1 // pred_check_branch
      %119 = sbr.rel (0) target = $region25
    $region24: #{linear_sub_relu.1} parent=1 // pred_region
      %s121 = ssub.s32 16, 16
      %122 = vsyncadd [#allocation5], %s121
      %s124 = sshll.u32 [#allocation6], 4
      %s125 = int_to_ptr.vmem [resolvable:$true] %s124
      %127 = dma.vmem_to_hbm [thread:$0]  %s125, 16, %s4, [#allocation5]
    $region25: #{linear_sub_relu.1} parent=1 // pred_fallthru
      _
    // Predicated region
    $region26: #{linear_sub_relu.1} parent=1 // pred_check
      _
    $region27: #{linear_sub_relu.1} parent=1 // pred_check_branch
      %129 = sbr.rel (0) target = $region29
    $region28: #{linear_sub_relu.1} parent=1 // pred_region
      %130 = dma.done [#allocation5], 16
    $region29: #{linear_sub_relu.1} parent=1 // pred_fallthru
      _
    %131 = vsyncpa [#allocation4], 1
    %132 = vsyncpa [#allocation5], 1

</llo_original>
